<compile_context>
chip_gen: v5e
topology: v5e:2x2
jax: 0.10.0
libtpu: 0.0.40
codegen_flags: <defaults>
</compile_context>

<pallas_src>
import functools

import jax
import jax.numpy as jnp
from jax.experimental import pallas as pl
from jax.experimental.pallas import tpu as pltpu

EPS = 1e-5  # nn.InstanceNorm2d default


def _cdiv(a, b):
    return (a + b - 1) // b


def _round_up(x, m):
    return ((x + m - 1) // m) * m


def _sublane_pack(dtype):
    # sublane packing: 8 rows for 32-bit, 16 for 16-bit, 32 for 8-bit dtypes
    itemsize = jnp.dtype(dtype).itemsize
    return max(8, (4 // itemsize) * 8)


def _vmem_budgets():
    """Per-generation scoped-VMEM request and per-step block budget (bytes)."""
    cap = 64 * 1024 * 1024  # conservative default == v7x per-TensorCore VMEM
    try:
        info = pltpu.get_tpu_info()
        cap = int(getattr(info, "vmem_capacity_bytes", cap)) or cap
    except Exception:
        pass
    # 96 MiB on v5e/v6e (128 MiB physical), 48 MiB on v7x (64 MiB physical).
    vmem_limit = min(96 * 1024 * 1024, (cap * 3) // 4)
    # Headroom for gamma/beta buffers, semaphores and compiler-internal scratch.
    vmem_budget = max(8 * 1024 * 1024, vmem_limit - 12 * 1024 * 1024)
    return vmem_limit, vmem_budget


# ---------------------------------------------------------------------------
# Fast path: one fused pass, full (unpadded) spatial extent per block.
# ---------------------------------------------------------------------------
def _instnorm_fused_kernel(x_ref, g_ref, b_ref, o_ref, *, inv_hw):
    # x_ref: (rt, HW)   one row == one (n, c) instance's spatial plane
    # g_ref/b_ref: (rt, 1)  per-row affine params
    x = x_ref[...].astype(jnp.float32)
    mean = jnp.sum(x, axis=-1, keepdims=True) * inv_hw
    xc = x - mean                                   # centered (two-pass var)
    var = jnp.sum(xc * xc, axis=-1, keepdims=True) * inv_hw
    scale = jax.lax.rsqrt(var + EPS) * g_ref[...]   # (rt, 1) scalar math
    o_ref[...] = (xc * scale + b_ref[...]).astype(o_ref.dtype)


# ---------------------------------------------------------------------------
# Chunked fallback: spatial plane too large for one VMEM block.
# Pass 1 accumulates per-row sums across spatial chunks and emits scale/shift,
# Pass 2 applies the normalization chunk by chunk.
# ---------------------------------------------------------------------------
def _stats_kernel(x_ref, g_ref, b_ref, scale_ref, shift_ref, s1_ref, s2_ref,
                  *, hw, chunk, inv_hw):
    j = pl.program_id(1)

    @pl.when(j == 0)
    def _():
        s1_ref[...] = jnp.zeros_like(s1_ref)
        s2_ref[...] = jnp.zeros_like(s2_ref)

    x = x_ref[...].astype(jnp.float32)
    if hw % chunk != 0:
        # mask the trailing partial chunk (no host-side padding of x)
        col = jax.lax.broadcasted_iota(jnp.int32, x.shape, 1) + j * chunk
        x = jnp.where(col < hw, x, 0.0)
    s1_ref[...] += jnp.sum(x, axis=-1, keepdims=True)
    s2_ref[...] += jnp.sum(x * x, axis=-1, keepdims=True)

    @pl.when(j == pl.num_programs(1) - 1)
    def _():
        mean = s1_ref[...] * inv_hw
        var = jnp.maximum(s2_ref[...] * inv_hw - mean * mean, 0.0)
        scale = jax.lax.rsqrt(var + EPS) * g_ref[...]
        scale_ref[...] = scale
        shift_ref[...] = b_ref[...] - mean * scale


def _normalize_kernel(x_ref, scale_ref, shift_ref, o_ref):
    x = x_ref[...].astype(jnp.float32)
    o_ref[...] = (x * scale_ref[...] + shift_ref[...]).astype(o_ref.dtype)


# ---------------------------------------------------------------------------
# Wrapper
# ---------------------------------------------------------------------------
def inst_norm_2d(x, gamma, beta, *, vmem_budget_bytes=None):
    """Instance norm over NCHW input with per-channel affine params."""
    N, C, H, W = x.shape
    NC, HW = N * C, H * W
    itemsize = jnp.dtype(x.dtype).itemsize
    pack = _sublane_pack(x.dtype)
    inv_hw = 1.0 / float(HW)

    vmem_limit, vmem_budget = _vmem_budgets()
    if vmem_budget_bytes is not None:   # test hook: force the chunked path
        vmem_budget = vmem_budget_bytes

    x2 = x.reshape(NC, HW)
    # one affine value per (n, c) row (channel params replicated over batch)
    g_rows = jnp.tile(gamma.astype(jnp.float32), N).reshape(NC, 1)
    b_rows = jnp.tile(beta.astype(jnp.float32), N).reshape(NC, 1)

    # Per-element VMEM cost of a resident (rt, HW) block:
    #   2 double-buffered input blocks + 2 output blocks (native dtype)
    #   + ~3-4 full-block f32 temporaries inside the kernel (cast, centered,
    #   squared/product-before-cast).
    bytes_per_elem = 4 * itemsize + 16

    rt_vmem = (vmem_budget // (bytes_per_elem * HW)) // pack * pack

    if rt_vmem >= pack:
        # ------------------ fast path: fused single pass -------------------
        # Cap the native input block at ~4 MiB (HBM roofline is reached well
        # before that) and keep >= 8 grid steps when NC allows (>= 4 per core
        # on v7x) so the auto double-buffering can actually overlap DMA.
        block_cap = 4 * 1024 * 1024
        rt_cap = max(pack, (block_cap // (itemsize * HW)) // pack * pack)
        target_blocks = max(1, min(8, _cdiv(NC, pack)))
        rt_target = _round_up(_cdiv(NC, target_blocks), pack)
        rt = max(pack, min(rt_vmem, rt_cap, rt_target))
        grid = (_cdiv(NC, rt),)   # trailing partial row block handled by Pallas

        out2 = pl.pallas_call(
            functools.partial(_instnorm_fused_kernel, inv_hw=inv_hw),
            out_shape=jax.ShapeDtypeStruct((NC, HW), x.dtype),
            grid_spec=pltpu.PrefetchScalarGridSpec(
                num_scalar_prefetch=0,
                grid=grid,
                in_specs=[
                    pl.BlockSpec((rt, HW), lambda i: (i, 0)),
                    pl.BlockSpec((rt, 1), lambda i: (i, 0)),
                    pl.BlockSpec((rt, 1), lambda i: (i, 0)),
                ],
                out_specs=pl.BlockSpec((rt, HW), lambda i: (i, 0)),
            ),
            compiler_params=pltpu.CompilerParams(
                dimension_semantics=("parallel",),
                vmem_limit_bytes=vmem_limit,
            ),
        )(x2, g_rows, b_rows)
        return out2.reshape(N, C, H, W)

    # ------------------ chunked fallback: two passes ------------------------
    rt = pack
    chunk = (vmem_budget // (bytes_per_elem * rt)) // 128 * 128
    chunk = max(128, min(chunk, _round_up(HW, 128)))
    n_row_blocks = _cdiv(NC, rt)
    n_chunks = _cdiv(HW, chunk)

    scale_rows, shift_rows = pl.pallas_call(
        functools.partial(_stats_kernel, hw=HW, chunk=chunk, inv_hw=inv_hw),
        out_shape=(
            jax.ShapeDtypeStruct((NC, 1), jnp.float32),
            jax.ShapeDtypeStruct((NC, 1), jnp.float32),
        ),
        grid_spec=pltpu.PrefetchScalarGridSpec(
            num_scalar_prefetch=0,
            grid=(n_row_blocks, n_chunks),
            in_specs=[
                pl.BlockSpec((rt, chunk), lambda i, j: (i, j)),
                pl.BlockSpec((rt, 1), lambda i, j: (i, 0)),
                pl.BlockSpec((rt, 1), lambda i, j: (i, 0)),
            ],
            out_specs=(
                pl.BlockSpec((rt, 1), lambda i, j: (i, 0)),
                pl.BlockSpec((rt, 1), lambda i, j: (i, 0)),
            ),
            scratch_shapes=[
                pltpu.VMEM((rt, 1), jnp.float32),
                pltpu.VMEM((rt, 1), jnp.float32),
            ],
        ),
        compiler_params=pltpu.CompilerParams(
            dimension_semantics=("parallel", "arbitrary"),
            vmem_limit_bytes=vmem_limit,
        ),
    )(x2, g_rows, b_rows)

    out2 = pl.pallas_call(
        _normalize_kernel,
        out_shape=jax.ShapeDtypeStruct((NC, HW), x.dtype),
        grid_spec=pltpu.PrefetchScalarGridSpec(
            num_scalar_prefetch=0,
            grid=(n_row_blocks, n_chunks),
            in_specs=[
                pl.BlockSpec((rt, chunk), lambda i, j: (i, j)),
                pl.BlockSpec((rt, 1), lambda i, j: (i, 0)),
                pl.BlockSpec((rt, 1), lambda i, j: (i, 0)),
            ],
            out_specs=pl.BlockSpec((rt, chunk), lambda i, j: (i, j)),
        ),
        compiler_params=pltpu.CompilerParams(
            dimension_semantics=("parallel", "parallel"),
            vmem_limit_bytes=vmem_limit,
        ),
    )(x2, scale_rows, shift_rows)

    return out2.reshape(N, C, H, W)


def inst_norm_2d_ref(x, gamma, beta):
    """Pure-JAX reference matching PyTorch InstanceNorm2d (training-mode stats)."""
    xf = x.astype(jnp.float32)
    mean = jnp.mean(xf, axis=(2, 3), keepdims=True)
    var = jnp.var(xf, axis=(2, 3), keepdims=True)  # biased
    xhat = (xf - mean) * jax.lax.rsqrt(var + EPS)
    y = xhat * gamma[None, :, None, None] + beta[None, :, None, None]
    return y.astype(x.dtype)


if __name__ == "__main__":
    key = jax.random.PRNGKey(0)
    kx, kg, kb = jax.random.split(key, 3)
    N, C, H, W = 2, 4, 16, 16

    x = jax.random.normal(kx, (N, C, H, W), dtype=jnp.float32)
    gamma = 1.0 + 0.1 * jax.random.normal(kg, (C,), dtype=jnp.float32)
    beta = 0.1 * jax.random.normal(kb, (C,), dtype=jnp.float32)

    y_ref = inst_norm_2d_ref(x, gamma, beta)

    # Fast fused path (per-generation VMEM budget).
    y = jax.block_until_ready(inst_norm_2d(x, gamma, beta))
    assert y.shape == (N, C, H, W)
    assert jnp.allclose(y, y_ref, atol=1e-4, rtol=1e-4)

    # Chunked fallback path (forced via a tiny block budget) — exercised so the
    # large-spatial-plane code path is validated too.
    y2 = jax.block_until_ready(
        inst_norm_2d(x, gamma, beta, vmem_budget_bytes=4096))
    assert jnp.allclose(y2, y_ref, atol=1e-4, rtol=1e-4)

    print("KERNEL_OK")
</pallas_src>

<mosaic_0001>
module attributes {stable_mosaic.version = 11 : i64} {
  func.func @_instnorm_fused_kernel(%arg0: i32, %arg1: memref<8x256xf32, #tpu.memory_space<vmem>>, %arg2: memref<8x1xf32, #tpu.memory_space<vmem>>, %arg3: memref<8x1xf32, #tpu.memory_space<vmem>>, %arg4: memref<8x256xf32, #tpu.memory_space<vmem>>) attributes {dimension_semantics = [#tpu.dimension_semantics<parallel>], iteration_bounds = array<i64: 1>, scalar_prefetch = 0 : i64, scratch_operands = 0 : i64, tpu.core_type = #tpu.core_type<tc>, window_params = [{transform_indices = @transform_0, window_bounds = array<i64: 8, 256>}, {transform_indices = @transform_1, window_bounds = array<i64: 8, 1>}, {transform_indices = @transform_2, window_bounds = array<i64: 8, 1>}, {transform_indices = @transform_3, window_bounds = array<i64: 8, 256>}]} {
    %c0 = arith.constant 0 : index
    %c0_0 = arith.constant 0 : index
    %0 = vector.load %arg1[%c0, %c0_0] : memref<8x256xf32, #tpu.memory_space<vmem>>, vector<8x256xf32>
    %cst = arith.constant dense<0.000000e+00> : vector<8xf32>
    %1 = vector.multi_reduction <add>, %0, %cst [1] : vector<8x256xf32> to vector<8xf32>
    %2 = vector.shape_cast %1 : vector<8xf32> to vector<8x1xf32>
    %cst_1 = arith.constant 3.906250e-03 : f32
    %3 = vector.broadcast %cst_1 : f32 to vector<8x1xf32>
    %4 = arith.mulf %2, %3 : vector<8x1xf32>
    %5 = vector.broadcast %4 : vector<8x1xf32> to vector<8x256xf32>
    %6 = arith.subf %0, %5 : vector<8x256xf32>
    %7 = arith.mulf %6, %6 : vector<8x256xf32>
    %cst_2 = arith.constant dense<0.000000e+00> : vector<8xf32>
    %8 = vector.multi_reduction <add>, %7, %cst_2 [1] : vector<8x256xf32> to vector<8xf32>
    %9 = vector.shape_cast %8 : vector<8xf32> to vector<8x1xf32>
    %cst_3 = arith.constant 3.906250e-03 : f32
    %10 = vector.broadcast %cst_3 : f32 to vector<8x1xf32>
    %11 = arith.mulf %9, %10 : vector<8x1xf32>
    %cst_4 = arith.constant 9.99999974E-6 : f32
    %12 = vector.broadcast %cst_4 : f32 to vector<8x1xf32>
    %13 = arith.addf %11, %12 : vector<8x1xf32>
    %14 = math.rsqrt %13 : vector<8x1xf32>
    %c0_5 = arith.constant 0 : index
    %c0_6 = arith.constant 0 : index
    %15 = vector.load %arg2[%c0_5, %c0_6] : memref<8x1xf32, #tpu.memory_space<vmem>>, vector<8x1xf32>
    %16 = arith.mulf %14, %15 : vector<8x1xf32>
    %17 = vector.broadcast %16 : vector<8x1xf32> to vector<8x256xf32>
    %18 = arith.mulf %6, %17 : vector<8x256xf32>
    %c0_7 = arith.constant 0 : index
    %c0_8 = arith.constant 0 : index
    %19 = vector.load %arg3[%c0_7, %c0_8] : memref<8x1xf32, #tpu.memory_space<vmem>>, vector<8x1xf32>
    %20 = vector.broadcast %19 : vector<8x1xf32> to vector<8x256xf32>
    %21 = arith.addf %18, %20 : vector<8x256xf32>
    %c0_9 = arith.constant 0 : index
    %c0_10 = arith.constant 0 : index
    %22 = vector.load %arg4[%c0_9, %c0_10] : memref<8x256xf32, #tpu.memory_space<vmem>>, vector<8x256xf32>
    tpu.vector_store %arg4[%c0_9, %c0_10], %21 {strides = array<i32>} : memref<8x256xf32, #tpu.memory_space<vmem>>, vector<8x256xf32>,
    return
  }
  func.func @transform_0(%arg0: i32) -> (i32, i32) {
    %c0_i32 = arith.constant 0 : i32
    %c0_i32_0 = arith.constant 0 : i32
    return %arg0, %c0_i32 : i32, i32
  }
  func.func @transform_1(%arg0: i32) -> (i32, i32) {
    %c0_i32 = arith.constant 0 : i32
    %c0_i32_0 = arith.constant 0 : i32
    return %arg0, %c0_i32 : i32, i32
  }
  func.func @transform_2(%arg0: i32) -> (i32, i32) {
    %c0_i32 = arith.constant 0 : i32
    %c0_i32_0 = arith.constant 0 : i32
    return %arg0, %c0_i32 : i32, i32
  }
  func.func @transform_3(%arg0: i32) -> (i32, i32) {
    %c0_i32 = arith.constant 0 : i32
    %c0_i32_0 = arith.constant 0 : i32
    return %arg0, %c0_i32 : i32, i32
  }
}

</mosaic_0001>

<llo_original>
// kernel: tpu_custom_call.1
$region0: #{tpu_custom_call.1}
  #allocation0 [shape = 'u32[]', space=smem, size = 0x4, offset = 0x4, fixed_abs, tag = 'smem constant byte address 0x4 - core index']
  #allocation1 [shape = 'u32[72,128]{1,0:T(1,128)}', space=vmem, size = 0x9000, scoped, tag = 'internal scratch']
  %s0 = inlined_call_operand.vmem [shape: f32[8,256], index: 0, kind: input, shape index: {}]
  %s1 = inlined_call_operand.vmem [shape: f32[8,1], index: 1, kind: input, shape index: {}]
  %s2 = inlined_call_operand.vmem [shape: f32[8,1], index: 2, kind: input, shape index: {}]
  %s3 = inlined_call_operand.hbm [shape: f32[8,256], index: 3, kind: output, shape index: {}]
  %s4 = sld [smem:[#allocation0]]
  $region22: #{tpu_custom_call.1} parent=0
    _
  %s6 = ssub.s32 1, %s4
  %s7 = scalar_select 0, %s6, %s4
  $region1: #{tpu_custom_call.1} parent=0
    #allocation2 [shape = 'u8[8192]{0}', space=vmem, size = 0x2000, scoped, tag = 'output window, operand 0, single buffered']
    #allocation3 [shape = 's32[1]{0}', space=sflag, size = 0x4, scoped, tag = 'scoped memory for tpu_custom_call.1']
    %8 = vsyncpa [#allocation3], 0
    // Predicated region
    $region2: #{tpu_custom_call.1} parent=1 // pred_check
      _
    $region3: #{tpu_custom_call.1} parent=1 // pred_check_branch
      %10 = sbr.rel (0) target = $region5
    $region4: #{tpu_custom_call.1} parent=1 // pred_region
      _
    $region5: #{tpu_custom_call.1} parent=1 // pred_fallthru
      _
    // Predicated region
    $region6: #{tpu_custom_call.1} parent=1 // pred_check
      _
    $region7: #{tpu_custom_call.1} parent=1 // pred_check_branch
      %12 = sbr.rel (0) target = $region9
    $region8: #{tpu_custom_call.1} parent=1 // pred_region
      _
    $region9: #{tpu_custom_call.1} parent=1 // pred_fallthru
      _
    // Predicated region
    $region10: #{tpu_custom_call.1} parent=1 // pred_check
      _
    $region11: #{tpu_custom_call.1} parent=1 // pred_check_branch
      %14 = sbr.rel (0) target = $region13
    $region12: #{tpu_custom_call.1} parent=1 // pred_region
      _
    $region13: #{tpu_custom_call.1} parent=1 // pred_fallthru
      _
    %v15 = vld [vmem:[%s0] sm:$0xff]
    %v16 = vld [vmem:[%s0 + $0x8] sm:$0xff]
    %v17 = vadd.f32 %v15, %v16
    %18 = vadd.xlane.f32.xlu0 %v17
    %v19 = vpop.xlane.xlu0 %18
    %v20 = vmul.f32 %v19, 0.00390625
    %v21 = vsub.f32 %v15, %v20
    %v22 = vsub.f32 %v16, %v20
    %v23 = vmul.f32 %v21, %v21
    %v24 = vmul.f32 %v22, %v22
    %v25 = vadd.f32 %v23, %v24
    %26 = vadd.xlane.f32.xlu0 %v25
    %v27 = vpop.xlane.xlu0 %26
    %v28 = vmul.f32 %v27, 0.00390625
    %v29 = vadd.f32 %v28, 1e-05
    %v30 = vrsqrt.pop %v29
    %v31 = vmul.f32 %v30, %v29
    %v32 = vmul.f32 %v31, %v30
    %v33 = vmul.f32 0.5, %v32
    %v34 = vsub.f32 1.5, %v33
    %v35 = vmul.f32 %v30, %v34
    %vm36 = vweird.f32 %v29
    %vm37 = vweird.f32 %v30
    %vm38 = vmor %vm36, %vm37
    %v39 = vsel %vm38, %v30, %v35
    %v40 = vld [vmem:[%s1] sm:$0xff]
    %v41 = vmul.f32 %v39, %v40
    %43 = vset.pattern.permute.xlu0 0
    %44 = vperm.xlu0 %43, %v41
    %v45 = vpop.permute.xlu0 %44
    %v47 = vmul.f32 %v21, %v45
    %v48 = vmul.f32 %v22, %v45
    %v49 = vld [vmem:[%s2] sm:$0xff]
    %51 = vset.pattern.permute.xlu0 0
    %52 = vperm.xlu0 %51, %v49
    %v53 = vpop.permute.xlu0 %52
    %v55 = vadd.f32 %v47, %v53
    %v56 = vadd.f32 %v48, %v53
    %57 = vst [vmem:[#allocation2] sm:$0xff] %v55
    %58 = vst [vmem:[#allocation2 + $0x8] sm:$0xff] %v56
    // Predicated region
    $region14: #{tpu_custom_call.1} parent=1 // pred_check
      _
    $region15: #{tpu_custom_call.1} parent=1 // pred_check_branch
      %60 = sbr.rel (0) target = $region17
    $region16: #{tpu_custom_call.1} parent=1 // pred_region
      %62 = vsyncadd [#allocation3], 0
      %s64 = sshll.u32 [#allocation2], 4
      %s65 = int_to_ptr.vmem [resolvable:$true] %s64
      %s66 = sshll.u32 %s3, 4
      %s67 = int_to_ptr.hbm [resolvable:$true] %s66
      %69 = dma.vmem_to_hbm [thread:$0]  %s65, 256, %s67, [#allocation3]
    $region17: #{tpu_custom_call.1} parent=1 // pred_fallthru
      _
    // Predicated region
    $region18: #{tpu_custom_call.1} parent=1 // pred_check
      _
    $region19: #{tpu_custom_call.1} parent=1 // pred_check_branch
      %71 = sbr.rel (0) target = $region21
    $region20: #{tpu_custom_call.1} parent=1 // pred_region
      %73 = dma.done [#allocation3], 256
    $region21: #{tpu_custom_call.1} parent=1 // pred_fallthru
      _
    %74 = vsyncpa [#allocation3], 1

</llo_original>
